<compile_context>
chip_gen: v7x
topology: tpu7x:2x2x1
jax: 0.10.0
libtpu: 0.0.40
codegen_flags: <defaults>
</compile_context>

<pallas_src>
import functools

import jax
import jax.numpy as jnp
from jax import lax
from jax.experimental import pallas as pl
from jax.experimental.pallas import tpu as pltpu
import numpy as np


def _router_kernel(x_ref, w_ref, b_ref, noise_ref, out_ref, idx_ref, *, num_experts):
    E = num_experts
    x = x_ref[...]                                              # (tm, D) token-major

    # One fused MXU pass (stream x, stationary fused weights), then one small
    # XLU transpose so everything downstream is lane-dense (tokens on lanes).
    both = jnp.dot(x, w_ref[...], preferred_element_type=jnp.float32)   # (tm, 2E)
    both_t = jnp.transpose(both) + b_ref[...]                   # (2E, tm) expert-major

    logits = both_t[:E, :]                                      # (E, tm)  sublane slice
    noise_logits = both_t[E:, :]                                # (E, tm)  sublane slice

    # noisy = logits + randn * softplus(noise_logits)   (randn streamed in)
    softplus = jnp.logaddexp(noise_logits, 0.0)
    noisy = logits + noise_ref[...] * softplus                  # (E, tm)

    iota = lax.broadcasted_iota(jnp.int32, noisy.shape, 0)      # expert id per row

    # top-1 / top-2 over the expert (sublane) axis; lowest index wins ties,
    # matching lax.top_k / torch.topk.  Every op here is 128-lane dense.
    m1 = jnp.max(noisy, axis=0, keepdims=True)                  # (1, tm)
    i1 = jnp.min(jnp.where(noisy == m1, iota, E), axis=0, keepdims=True)
    masked = jnp.where(iota == i1, -jnp.inf, noisy)
    m2 = jnp.max(masked, axis=0, keepdims=True)
    i2 = jnp.min(jnp.where(masked == m2, iota, E), axis=0, keepdims=True)

    # Sparse softmax: nonzero only at the two selected experts.
    sel = (iota == i1) | (iota == i2)
    p = jnp.where(sel, jnp.exp(noisy - m1), 0.0)
    denom = jnp.sum(p, axis=0, keepdims=True)
    out_ref[...] = (p * pl.reciprocal(denom, approx=False)).astype(out_ref.dtype)

    # Lane-dense index store: (2, tm) -> unmasked vst per strip.
    idx_ref[...] = jnp.concatenate([i1, i2], axis=0).astype(jnp.int32)


def _round_up(x, m):
    return ((x + m - 1) // m) * m


def _cdiv(a, b):
    return -(-a // b)


def _choose_tm(n_tokens, d, e, x_itemsize=4, vmem_budget_bytes=24 << 20):
    """Largest 128-aligned token tile such that the double-buffered streams fit
    the scoped-VMEM budget (32 MiB default on v7x), capped at 4096, while
    keeping >=4 (or >=2) grid steps so v7x's two TensorCores both get work and
    the DMA pipeline stays warm.  Blocks never exceed the token extent."""
    if n_tokens <= 128:
        return max(1, n_tokens)          # single exact block (block == array extent)
    # Streamed bytes per token row (double-buffered): x(D) + noise(E) + out(E) + idx(2).
    bytes_per_row = 2 * (d * x_itemsize + 4 * (2 * e + 2))
    tm = min(4096, int(vmem_budget_bytes // bytes_per_row))
    tm = min(tm, (n_tokens // 128) * 128)            # never larger than the array
    for min_steps in (4, 2):                          # prefer >=4 grid steps, else >=2
        if n_tokens >= min_steps * 128:
            tm = min(tm, _round_up(_cdiv(n_tokens, min_steps), 128))
            break
    return max(128, (tm // 128) * 128)


@functools.partial(jax.jit, static_argnames=("tm",))
def _router_call(xf, w, b, noise_t, *, tm):
    N, D = xf.shape
    two_e = w.shape[1]
    E = two_e // 2
    top_k = 2

    kernel = functools.partial(_router_kernel, num_experts=E)

    # Ragged tail handled by partial edge blocks (masked edge DMAs): no jnp.pad
    # copy of the dominant x stream.
    grid = pl.cdiv(N, tm)

    out_t, idx_t = pl.pallas_call(
        kernel,
        out_shape=(
            jax.ShapeDtypeStruct((E, N), jnp.float32),      # expert-major, lane-dense
            jax.ShapeDtypeStruct((top_k, N), jnp.int32),
        ),
        grid_spec=pltpu.PrefetchScalarGridSpec(
            num_scalar_prefetch=0,
            grid=(grid,),
            in_specs=[
                pl.BlockSpec((tm, D), lambda i: (i, 0)),        # x tile (token-major)
                pl.BlockSpec((D, two_e), lambda i: (0, 0)),     # resident fused weights
                pl.BlockSpec((two_e, 1), lambda i: (0, 0)),     # resident fused biases
                pl.BlockSpec((E, tm), lambda i: (0, i)),        # noise tile (expert-major)
            ],
            out_specs=[
                pl.BlockSpec((E, tm), lambda i: (0, i)),
                pl.BlockSpec((top_k, tm), lambda i: (0, i)),
            ],
        ),
        compiler_params=pltpu.CompilerParams(
            dimension_semantics=("parallel",),
            vmem_limit_bytes=32 * 1024 * 1024,
        ),
        cost_estimate=pl.CostEstimate(
            flops=2 * N * D * two_e,
            transcendentals=3 * N * E,                 # softplus + exp
            bytes_accessed=int(N * D * xf.dtype.itemsize
                               + N * 4 * (2 * E + top_k)
                               + D * two_e * w.dtype.itemsize),
        ),
    )(xf, w, b, noise_t)
    return out_t, idx_t


def noisy_topk_router(x, w_route, b_route, w_noise, b_noise, noise, *, tm=None):
    """Pallas implementation of NoisyTopkRouter.forward (top_k = 2).

    x:       (B, T, D)  float32 or bfloat16 (bf16 halves the dominant HBM stream)
    w_*:     (D, E),  b_*: (1, E)
    noise:   (B, T, E) standard-normal samples (== torch.randn_like(logits))
    returns: router_output (B, T, E) float32, indices (B, T, 2) int32
    """
    B, T, D = x.shape
    E = w_route.shape[1]
    N = B * T
    if tm is None:
        tm = _choose_tm(N, D, E, x_itemsize=jnp.dtype(x.dtype).itemsize)

    # Fuse the two Linear layers into one MXU operand; bias goes expert-major.
    w = jnp.concatenate([w_route, w_noise], axis=1).astype(x.dtype)          # (D, 2E)
    b = jnp.concatenate([b_route, b_noise], axis=1).astype(jnp.float32)
    b = b.reshape(2 * E, 1)                                                  # (2E, 1)

    # Only the tiny per-token arrays get transposed (E*4 B/token), never x.
    noise_t = jnp.transpose(noise.reshape(N, E))                             # (E, N)

    out_t, idx_t = _router_call(x.reshape(N, D), w, b, noise_t, tm=tm)

    out = jnp.transpose(out_t).reshape(B, T, E)
    idx = jnp.transpose(idx_t).reshape(B, T, 2)
    return out, idx


def _reference(x, w_route, b_route, w_noise, b_noise, noise):
    logits = x @ w_route + b_route
    noise_logits = x @ w_noise + b_noise
    noisy = logits + noise * jax.nn.softplus(noise_logits)
    E = noisy.shape[-1]
    _, ind = lax.top_k(noisy, 2)
    mask = jax.nn.one_hot(ind, E).sum(-2) > 0
    sparse = jnp.where(mask, noisy, -jnp.inf)
    return jax.nn.softmax(sparse, axis=-1), ind, noisy


def _run_case(key, B, T, D, E):
    kx, kn, kw1, kb1, kw2, kb2 = jax.random.split(key, 6)
    x = jax.random.normal(kx, (B, T, D), dtype=jnp.float32)
    noise = jax.random.normal(kn, (B, T, E), dtype=jnp.float32)   # == randn_like(logits)

    # deterministic nn.Linear-style init: U(-1/sqrt(D), 1/sqrt(D))
    bound = 1.0 / np.sqrt(D)
    w_route = jax.random.uniform(kw1, (D, E), jnp.float32, -bound, bound)
    b_route = jax.random.uniform(kb1, (1, E), jnp.float32, -bound, bound)
    w_noise = jax.random.uniform(kw2, (D, E), jnp.float32, -bound, bound)
    b_noise = jax.random.uniform(kb2, (1, E), jnp.float32, -bound, bound)

    out, idx = noisy_topk_router(x, w_route, b_route, w_noise, b_noise, noise)
    jax.block_until_ready((out, idx))

    ref_out, ref_idx, ref_noisy = _reference(x, w_route, b_route, w_noise, b_noise, noise)

    kidx = np.sort(np.asarray(idx), axis=-1)
    ridx = np.sort(np.asarray(ref_idx), axis=-1)
    match = np.all(kidx == ridx, axis=-1)                       # (B, T)

    # Where the top-2 sets agree (the norm), probabilities must agree tightly.
    np.testing.assert_allclose(np.asarray(out)[match], np.asarray(ref_out)[match],
                               rtol=1e-3, atol=1e-3)
    # Any disagreement must be a genuine numerical near-tie in the noisy logits
    # (kernel vs XLA matmul accumulation order can differ at ~1e-5 level).
    nz = np.asarray(ref_noisy)
    for b_i, t_i in np.argwhere(~match):
        diff = sorted(set(kidx[b_i, t_i].tolist()) ^ set(ridx[b_i, t_i].tolist()))
        spread = float(np.ptp(nz[b_i, t_i, diff]))
        assert spread < 5e-3, f"top-2 mismatch at {(b_i, t_i)} is not a tie ({spread})"


if __name__ == "__main__":
    key = jax.random.PRNGKey(0)
    k1, k2 = jax.random.split(key)

    # Small config consistent with the module (n_embed=384, num_experts=8, top_k=2).
    _run_case(k1, B=2, T=8, D=384, E=8)
    # Ragged multi-step grid: exercises partial edge blocks + parallel grid steps.
    _run_case(k2, B=2, T=300, D=384, E=8)

    # TODO(synk): noise is taken as an explicit input for deterministic parity with
    # torch.randn_like; an in-kernel pltpu PRNG variant would remove that stream.
    print("KERNEL_OK")
</pallas_src>

<mosaic_0001>
module attributes {stable_mosaic.version = 11 : i64} {
  func.func @_router_kernel(%arg0: i32, %arg1: memref<16x384xf32, #tpu.memory_space<vmem>>, %arg2: memref<384x16xf32, #tpu.memory_space<vmem>>, %arg3: memref<16x1xf32, #tpu.memory_space<vmem>>, %arg4: memref<8x16xf32, #tpu.memory_space<vmem>>, %arg5: memref<8x16xf32, #tpu.memory_space<vmem>>, %arg6: memref<2x16xi32, #tpu.memory_space<vmem>>) attributes {dimension_semantics = [#tpu.dimension_semantics<parallel>], iteration_bounds = array<i64: 1>, scalar_prefetch = 0 : i64, scratch_operands = 0 : i64, tpu.core_type = #tpu.core_type<tc>, window_params = [{transform_indices = @transform_0, window_bounds = array<i64: 16, 384>}, {pipeline_mode = #tpu.pipeline_mode<synchronous>, transform_indices = @transform_1, window_bounds = array<i64: 384, 16>}, {pipeline_mode = #tpu.pipeline_mode<synchronous>, transform_indices = @transform_2, window_bounds = array<i64: 16, 1>}, {transform_indices = @transform_3, window_bounds = array<i64: 8, 16>}, {transform_indices = @transform_4, window_bounds = array<i64: 8, 16>}, {transform_indices = @transform_5, window_bounds = array<i64: 2, 16>}]} {
    %c0 = arith.constant 0 : index
    %c0_0 = arith.constant 0 : index
    %0 = vector.load %arg1[%c0, %c0_0] : memref<16x384xf32, #tpu.memory_space<vmem>>, vector<16x384xf32>
    %c0_1 = arith.constant 0 : index
    %c0_2 = arith.constant 0 : index
    %1 = vector.load %arg2[%c0_1, %c0_2] : memref<384x16xf32, #tpu.memory_space<vmem>>, vector<384x16xf32>
    %cst = arith.constant dense<0.000000e+00> : vector<16x16xf32>
    %2 = tpu.matmul %0, %1, %cst {dimension_numbers = #tpu.dot_dimension_numbers<[1], [0], [0], [1], [0, 0, 1, 1], [], []>} : vector<16x384xf32>, vector<384x16xf32>, vector<16x16xf32> -> vector<16x16xf32>
    %3 = tpu.transpose %2, [1, 0] : vector<16x16xf32> -> vector<16x16xf32>
    %c0_3 = arith.constant 0 : index
    %c0_4 = arith.constant 0 : index
    %4 = vector.load %arg3[%c0_3, %c0_4] : memref<16x1xf32, #tpu.memory_space<vmem>>, vector<16x1xf32>
    %5 = vector.broadcast %4 : vector<16x1xf32> to vector<16x16xf32>
    %6 = arith.addf %3, %5 : vector<16x16xf32>
    %7 = vector.extract_strided_slice %6 {offsets = [0, 0], sizes = [8, 16], strides = [1, 1]} : vector<16x16xf32> to vector<8x16xf32>
    %8 = vector.extract_strided_slice %6 {offsets = [8, 0], sizes = [8, 16], strides = [1, 1]} : vector<16x16xf32> to vector<8x16xf32>
    %cst_5 = arith.constant 0.000000e+00 : f32
    %9 = vector.broadcast %cst_5 : f32 to vector<8x16xf32>
    %10 = arith.maximumf %8, %9 : vector<8x16xf32>
    %11 = vector.broadcast %cst_5 : f32 to vector<8x16xf32>
    %12 = arith.subf %8, %11 : vector<8x16xf32>
    %13 = arith.cmpf one, %12, %12 : vector<8x16xf32>
    %14 = vector.broadcast %cst_5 : f32 to vector<8x16xf32>
    %15 = arith.addf %8, %14 : vector<8x16xf32>
    %16 = math.absf %12 : vector<8x16xf32>
    %cst_6 = arith.constant 0.000000e+00 : f32
    %17 = vector.broadcast %cst_6 : f32 to vector<8x16xf32>
    %18 = arith.subf %17, %16 : vector<8x16xf32>
    %19 = math.exp %18 : vector<8x16xf32>
    %20 = math.log1p %19 : vector<8x16xf32>
    %21 = arith.addf %10, %20 : vector<8x16xf32>
    %22 = arith.select %13, %15, %21 : vector<8x16xi1>, vector<8x16xf32>
    %c0_7 = arith.constant 0 : index
    %c0_8 = arith.constant 0 : index
    %23 = vector.load %arg4[%c0_7, %c0_8] : memref<8x16xf32, #tpu.memory_space<vmem>>, vector<8x16xf32>
    %24 = arith.mulf %23, %22 : vector<8x16xf32>
    %25 = arith.addf %7, %24 : vector<8x16xf32>
    %26 = tpu.iota {dimensions = array<i32: 0>} : vector<8x16xi32>
    %cst_9 = arith.constant dense<0xFF800000> : vector<16xf32>
    %27 = vector.multi_reduction <maximumf>, %25, %cst_9 [0] : vector<8x16xf32> to vector<16xf32>
    %28 = vector.shape_cast %27 : vector<16xf32> to vector<1x16xf32>
    %29 = vector.broadcast %28 : vector<1x16xf32> to vector<8x16xf32>
    %30 = arith.cmpf oeq, %25, %29 : vector<8x16xf32>
    %c8_i32 = arith.constant 8 : i32
    %31 = vector.broadcast %c8_i32 : i32 to vector<8x16xi32>
    %32 = arith.select %30, %26, %31 : vector<8x16xi1>, vector<8x16xi32>
    %cst_10 = arith.constant dense<2147483647> : vector<16xi32>
    %33 = vector.multi_reduction <minsi>, %32, %cst_10 [0] : vector<8x16xi32> to vector<16xi32>
    %34 = vector.shape_cast %33 : vector<16xi32> to vector<1x16xi32>
    %35 = vector.broadcast %34 : vector<1x16xi32> to vector<8x16xi32>
    %36 = arith.cmpi eq, %26, %35 : vector<8x16xi32>
    %cst_11 = arith.constant 0xFF800000 : f32
    %37 = vector.broadcast %cst_11 : f32 to vector<8x16xf32>
    %38 = arith.select %36, %37, %25 : vector<8x16xi1>, vector<8x16xf32>
    %cst_12 = arith.constant dense<0xFF800000> : vector<16xf32>
    %39 = vector.multi_reduction <maximumf>, %38, %cst_12 [0] : vector<8x16xf32> to vector<16xf32>
    %40 = vector.shape_cast %39 : vector<16xf32> to vector<1x16xf32>
    %41 = vector.broadcast %40 : vector<1x16xf32> to vector<8x16xf32>
    %42 = arith.cmpf oeq, %38, %41 : vector<8x16xf32>
    %c8_i32_13 = arith.constant 8 : i32
    %43 = vector.broadcast %c8_i32_13 : i32 to vector<8x16xi32>
    %44 = arith.select %42, %26, %43 : vector<8x16xi1>, vector<8x16xi32>
    %cst_14 = arith.constant dense<2147483647> : vector<16xi32>
    %45 = vector.multi_reduction <minsi>, %44, %cst_14 [0] : vector<8x16xi32> to vector<16xi32>
    %46 = vector.shape_cast %45 : vector<16xi32> to vector<1x16xi32>
    %47 = vector.broadcast %34 : vector<1x16xi32> to vector<8x16xi32>
    %48 = arith.cmpi eq, %26, %47 : vector<8x16xi32>
    %49 = vector.broadcast %46 : vector<1x16xi32> to vector<8x16xi32>
    %50 = arith.cmpi eq, %26, %49 : vector<8x16xi32>
    %51 = arith.ori %48, %50 : vector<8x16xi1>
    %52 = vector.broadcast %28 : vector<1x16xf32> to vector<8x16xf32>
    %53 = arith.subf %25, %52 : vector<8x16xf32>
    %54 = math.exp %53 : vector<8x16xf32>
    %cst_15 = arith.constant 0.000000e+00 : f32
    %55 = vector.broadcast %cst_15 : f32 to vector<8x16xf32>
    %56 = arith.select %51, %54, %55 : vector<8x16xi1>, vector<8x16xf32>
    %cst_16 = arith.constant dense<0.000000e+00> : vector<16xf32>
    %57 = vector.multi_reduction <add>, %56, %cst_16 [0] : vector<8x16xf32> to vector<16xf32>
    %58 = vector.shape_cast %57 : vector<16xf32> to vector<1x16xf32>
    %59 = tpu.reciprocal %58 : vector<1x16xf32> -> vector<1x16xf32>
    %60 = vector.broadcast %59 : vector<1x16xf32> to vector<8x16xf32>
    %61 = arith.mulf %56, %60 : vector<8x16xf32>
    %c0_17 = arith.constant 0 : index
    %c0_18 = arith.constant 0 : index
    %62 = vector.load %arg5[%c0_17, %c0_18] : memref<8x16xf32, #tpu.memory_space<vmem>>, vector<8x16xf32>
    tpu.vector_store %arg5[%c0_17, %c0_18], %61 {strides = array<i32>} : memref<8x16xf32, #tpu.memory_space<vmem>>, vector<8x16xf32>,
    %63 = tpu.concatenate %34, %46 in 0 : vector<1x16xi32>, vector<1x16xi32> -> vector<2x16xi32>
    %c0_19 = arith.constant 0 : index
    %c0_20 = arith.constant 0 : index
    %64 = vector.load %arg6[%c0_19, %c0_20] : memref<2x16xi32, #tpu.memory_space<vmem>>, vector<2x16xi32>
    tpu.vector_store %arg6[%c0_19, %c0_20], %63 {strides = array<i32>} : memref<2x16xi32, #tpu.memory_space<vmem>>, vector<2x16xi32>,
    return
  }
  func.func @transform_0(%arg0: i32) -> (i32, i32) {
    %c0_i32 = arith.constant 0 : i32
    %c0_i32_0 = arith.constant 0 : i32
    return %arg0, %c0_i32 : i32, i32
  }
  func.func @transform_1(%arg0: i32) -> (i32, i32) {
    %c0_i32 = arith.constant 0 : i32
    %c0_i32_0 = arith.constant 0 : i32
    %c0_i32_1 = arith.constant 0 : i32
    return %c0_i32, %c0_i32_0 : i32, i32
  }
  func.func @transform_2(%arg0: i32) -> (i32, i32) {
    %c0_i32 = arith.constant 0 : i32
    %c0_i32_0 = arith.constant 0 : i32
    %c0_i32_1 = arith.constant 0 : i32
    return %c0_i32, %c0_i32_0 : i32, i32
  }
  func.func @transform_3(%arg0: i32) -> (i32, i32) {
    %c0_i32 = arith.constant 0 : i32
    %c0_i32_0 = arith.constant 0 : i32
    return %c0_i32, %arg0 : i32, i32
  }
  func.func @transform_4(%arg0: i32) -> (i32, i32) {
    %c0_i32 = arith.constant 0 : i32
    %c0_i32_0 = arith.constant 0 : i32
    return %c0_i32, %arg0 : i32, i32
  }
  func.func @transform_5(%arg0: i32) -> (i32, i32) {
    %c0_i32 = arith.constant 0 : i32
    %c0_i32_0 = arith.constant 0 : i32
    return %c0_i32, %arg0 : i32, i32
  }
}

</mosaic_0001>

<llo_original>
// kernel: _router_call.1
$region0: #{_router_call.1}
  #allocation0 [shape = 'u32[]', space=smem, size = 0x4, offset = 0x4, fixed_abs, tag = 'smem constant byte address 0x4 - core index']
  #allocation1 [shape = 'u32[144,128]{1,0:T(1,128)}', space=vmem, size = 0x12000, scoped, tag = 'internal scratch']
  %s0 = inlined_call_operand.vmem [shape: f32[16,384], index: 0, kind: input, shape index: {}]
  %s1 = inlined_call_operand.vmem [shape: f32[384,16], index: 1, kind: input, shape index: {}]
  %s2 = inlined_call_operand.vmem [shape: f32[16,1], index: 2, kind: input, shape index: {}]
  %s3 = inlined_call_operand.vmem [shape: f32[8,16], index: 3, kind: input, shape index: {}]
  %s4 = inlined_call_operand.hbm [shape: f32[8,16], index: 4, kind: output, shape index: {0}]
  %s5 = inlined_call_operand.hbm [shape: s32[2,16], index: 5, kind: output, shape index: {1}]
  %6 = xla_tuple %s4, %s5
  %s7 = sld [smem:[#allocation0]]
  $region34: #{_router_call.1} parent=0
    _
  %s9 = ssub.s32 1, %s7
  %s10 = scalar_select 0, %s9, %s7
  $region1: #{_router_call.1} parent=0
    #allocation2 [shape = 'u8[4096]{0}', space=vmem, size = 0x1000, scoped, tag = 'output window, operand 0, single buffered']
    #allocation3 [shape = 's32[1]{0}', space=sflag, size = 0x4, scoped, tag = 'scoped memory for _router_call.1']
    #allocation4 [shape = 'u8[1024]{0}', space=vmem, size = 0x400, scoped, tag = 'output window, operand 1, single buffered']
    #allocation5 [shape = 's32[1]{0}', space=sflag, size = 0x4, scoped, tag = 'scoped memory for _router_call.1']
    %11 = vsyncpa [#allocation3], 0
    %12 = vsyncpa [#allocation5], 0
    // Predicated region
    $region2: #{_router_call.1} parent=1 // pred_check
      _
    $region3: #{_router_call.1} parent=1 // pred_check_branch
      %14 = sbr.rel (0) target = $region5
    $region4: #{_router_call.1} parent=1 // pred_region
      _
    $region5: #{_router_call.1} parent=1 // pred_fallthru
      _
    // Predicated region
    $region6: #{_router_call.1} parent=1 // pred_check
      _
    $region7: #{_router_call.1} parent=1 // pred_check_branch
      %16 = sbr.rel (0) target = $region9
    $region8: #{_router_call.1} parent=1 // pred_region
      _
    $region9: #{_router_call.1} parent=1 // pred_fallthru
      _
    // Predicated region
    $region10: #{_router_call.1} parent=1 // pred_check
      _
    $region11: #{_router_call.1} parent=1 // pred_check_branch
      %18 = sbr.rel (0) target = $region13
    $region12: #{_router_call.1} parent=1 // pred_region
      _
    $region13: #{_router_call.1} parent=1 // pred_fallthru
      _
    // Predicated region
    $region14: #{_router_call.1} parent=1 // pred_check
      _
    $region15: #{_router_call.1} parent=1 // pred_check_branch
      %20 = sbr.rel (0) target = $region17
    $region16: #{_router_call.1} parent=1 // pred_region
      _
    $region17: #{_router_call.1} parent=1 // pred_fallthru
      _
    %v21 = vld [vmem:[%s0] sm:$0xff]
    %v22 = vld [vmem:[%s0 + $0x8] sm:$0xff]
    %v23 = vld [vmem:[%s0 + $0x10] sm:$0xff]
    %v24 = vld [vmem:[%s0 + $0x18] sm:$0xff]
    %v25 = vld [vmem:[%s0 + $0x20] sm:$0xff]
    %v26 = vld [vmem:[%s0 + $0x28] sm:$0xff]
    %v27 = vld [vmem:[%s1] sm:$0xff]
    %v28 = vld [vmem:[%s1 + $0x8] sm:$0xff]
    %v29 = vld [vmem:[%s1 + $0x10] sm:$0xff]
    %v30 = vld [vmem:[%s1 + $0x18] sm:$0xff]
    %v31 = vld [vmem:[%s1 + $0x20] sm:$0xff]
    %v32 = vld [vmem:[%s1 + $0x28] sm:$0xff]
    %v33 = vld [vmem:[%s1 + $0x30] sm:$0xff]
    %v34 = vld [vmem:[%s1 + $0x38] sm:$0xff]
    %v35 = vld [vmem:[%s1 + $0x40] sm:$0xff]
    %v36 = vld [vmem:[%s1 + $0x48] sm:$0xff]
    %v37 = vld [vmem:[%s1 + $0x50] sm:$0xff]
    %v38 = vld [vmem:[%s1 + $0x58] sm:$0xff]
    %v39 = vld [vmem:[%s1 + $0x60] sm:$0xff]
    %v40 = vld [vmem:[%s1 + $0x68] sm:$0xff]
    %v41 = vld [vmem:[%s1 + $0x70] sm:$0xff]
    %v42 = vld [vmem:[%s1 + $0x78] sm:$0xff]
    %v43 = vld [vmem:[%s1 + $0x80] sm:$0xff]
    %v44 = vld [vmem:[%s1 + $0x88] sm:$0xff]
    %v45 = vld [vmem:[%s1 + $0x90] sm:$0xff]
    %v46 = vld [vmem:[%s1 + $0x98] sm:$0xff]
    %v47 = vld [vmem:[%s1 + $0xa0] sm:$0xff]
    %v48 = vld [vmem:[%s1 + $0xa8] sm:$0xff]
    %v49 = vld [vmem:[%s1 + $0xb0] sm:$0xff]
    %v50 = vld [vmem:[%s1 + $0xb8] sm:$0xff]
    %v51 = vld [vmem:[%s1 + $0xc0] sm:$0xff]
    %v52 = vld [vmem:[%s1 + $0xc8] sm:$0xff]
    %v53 = vld [vmem:[%s1 + $0xd0] sm:$0xff]
    %v54 = vld [vmem:[%s1 + $0xd8] sm:$0xff]
    %v55 = vld [vmem:[%s1 + $0xe0] sm:$0xff]
    %v56 = vld [vmem:[%s1 + $0xe8] sm:$0xff]
    %v57 = vld [vmem:[%s1 + $0xf0] sm:$0xff]
    %v58 = vld [vmem:[%s1 + $0xf8] sm:$0xff]
    %v59 = vld [vmem:[%s1 + $0x100] sm:$0xff]
    %v60 = vld [vmem:[%s1 + $0x108] sm:$0xff]
    %v61 = vld [vmem:[%s1 + $0x110] sm:$0xff]
    %v62 = vld [vmem:[%s1 + $0x118] sm:$0xff]
    %v63 = vld [vmem:[%s1 + $0x120] sm:$0xff]
    %v64 = vld [vmem:[%s1 + $0x128] sm:$0xff]
    %v65 = vld [vmem:[%s1 + $0x130] sm:$0xff]
    %v66 = vld [vmem:[%s1 + $0x138] sm:$0xff]
    %v67 = vld [vmem:[%s1 + $0x140] sm:$0xff]
    %v68 = vld [vmem:[%s1 + $0x148] sm:$0xff]
    %v69 = vld [vmem:[%s1 + $0x150] sm:$0xff]
    %v70 = vld [vmem:[%s1 + $0x158] sm:$0xff]
    %v71 = vld [vmem:[%s1 + $0x160] sm:$0xff]
    %v72 = vld [vmem:[%s1 + $0x168] sm:$0xff]
    %v73 = vld [vmem:[%s1 + $0x170] sm:$0xff]
    %v74 = vld [vmem:[%s1 + $0x178] sm:$0xff]
    %75 = vmatprep.subr.mxu0 0.0
    %76 = vmatpush1.msra.mxu0 %v27
    %77 = vmatprep.subr.mxu0 0.0
    %78 = vmatpush1.msra.mxu0 %v28
    %79 = vmatprep.subr.mxu0 0.0
    %80 = vmatpush1.msra.mxu0 %v29
    %81 = vmatprep.subr.mxu0 0.0
    %82 = vmatpush1.msra.mxu0 %v30
    %83 = vmatprep.subr.mxu0 0.0
    %84 = vmatpush1.msra.mxu0 %v31
    %85 = vmatprep.subr.mxu0 0.0
    %86 = vmatpush1.msra.mxu0 %v32
    %87 = vmatprep.subr.mxu0 0.0
    %88 = vmatpush1.msra.mxu0 %v33
    %89 = vmatprep.subr.mxu0 0.0
    %90 = vmatpush1.msra.mxu0 %v34
    %91 = vmatprep.subr.mxu0 0.0
    %92 = vmatpush1.msra.mxu0 %v35
    %93 = vmatprep.subr.mxu0 0.0
    %94 = vmatpush1.msra.mxu0 %v36
    %95 = vmatprep.subr.mxu0 0.0
    %96 = vmatpush1.msra.mxu0 %v37
    %97 = vmatprep.subr.mxu0 0.0
    %98 = vmatpush1.msra.mxu0 %v38
    %99 = vmatprep.subr.mxu0 0.0
    %100 = vmatpush1.msra.mxu0 %v39
    %101 = vmatprep.subr.mxu0 0.0
    %102 = vmatpush1.msra.mxu0 %v40
    %103 = vmatprep.subr.mxu0 0.0
    %104 = vmatpush1.msra.mxu0 %v41
    %105 = vmatprep.subr.mxu0 0.0
    %106 = vmatpush1.msra.mxu0 %v42
    %107 = vmatprep.subr.mxu0 0.0
    %108 = vmatpush1.msra.mxu0 %v43
    %109 = vmatprep.subr.mxu0 0.0
    %110 = vmatpush1.msra.mxu0 %v44
    %111 = vmatprep.subr.mxu0 0.0
    %112 = vmatpush1.msra.mxu0 %v45
    %113 = vmatprep.subr.mxu0 0.0
    %114 = vmatpush1.msra.mxu0 %v46
    %115 = vmatprep.subr.mxu0 0.0
    %116 = vmatpush1.msra.mxu0 %v47
    %117 = vmatprep.subr.mxu0 0.0
    %118 = vmatpush1.msra.mxu0 %v48
    %119 = vmatprep.subr.mxu0 0.0
    %120 = vmatpush1.msra.mxu0 %v49
    %121 = vmatprep.subr.mxu0 0.0
    %122 = vmatpush1.msra.mxu0 %v50
    %123 = vmatprep.subr.mxu0 0.0
    %124 = vmatpush1.msra.mxu0 %v51
    %125 = vmatprep.subr.mxu0 0.0
    %126 = vmatpush1.msra.mxu0 %v52
    %127 = vmatprep.subr.mxu0 0.0
    %128 = vmatpush1.msra.mxu0 %v53
    %129 = vmatprep.subr.mxu0 0.0
    %130 = vmatpush1.msra.mxu0 %v54
    %131 = vmatprep.subr.mxu0 0.0
    %132 = vmatpush1.msra.mxu0 %v55
    %133 = vmatprep.subr.mxu0 0.0
    %134 = vmatpush1.msra.mxu0 %v56
    %135 = vmatprep.subr.mxu0 0.0
    %136 = vmatpush1.msra.mxu0 %v57
    %137 = vmatprep.subr.mxu0 0.0
    %138 = vmatpush1.msra.mxu0 %v58
    %139 = vmatprep.mubr.f32.mxu0 %v22
    %140 = vmatmul.mubr.f32.gmra.mrb[0].mxu0 %v21
    %v141 = vpop.f32.mrb[0].mxu0
    %v142 = vadd.f32 0.0, %v141
    %v143 = vpop.f32.mrb[0].mxu0
    %144 = vmatprep.mubr.f32.mxu0 %v25
    %145 = vmatmul.mubr.f32.gmra.mrb[0].mxu0 %v24
    %v146 = vpop.f32.mrb[0].mxu0
    %v147 = vadd.f32 0.0, %v146
    %v148 = vpop.f32.mrb[0].mxu0
    %149 = vdwg.mxu0
    %150 = vmatprep.subr.mxu0 0.0
    %151 = vmatpush1.msra.mxu0 %v59
    %152 = vmatprep.subr.mxu0 0.0
    %153 = vmatpush1.msra.mxu0 %v60
    %154 = vmatprep.subr.mxu0 0.0
    %155 = vmatpush1.msra.mxu0 %v61
    %156 = vmatprep.subr.mxu0 0.0
    %157 = vmatpush1.msra.mxu0 %v62
    %158 = vmatprep.subr.mxu0 0.0
    %159 = vmatpush1.msra.mxu0 %v63
    %160 = vmatprep.subr.mxu0 0.0
    %161 = vmatpush1.msra.mxu0 %v64
    %162 = vmatprep.subr.mxu0 0.0
    %163 = vmatpush1.msra.mxu0 %v65
    %164 = vmatprep.subr.mxu0 0.0
    %165 = vmatpush1.msra.mxu0 %v66
    %166 = vmatprep.subr.mxu0 0.0
    %167 = vmatpush1.msra.mxu0 %v67
    %168 = vmatprep.subr.mxu0 0.0
    %169 = vmatpush1.msra.mxu0 %v68
    %170 = vmatprep.subr.mxu0 0.0
    %171 = vmatpush1.msra.mxu0 %v69
    %172 = vmatprep.subr.mxu0 0.0
    %173 = vmatpush1.msra.mxu0 %v70
    %174 = vmatprep.subr.mxu0 0.0
    %175 = vmatpush1.msra.mxu0 %v71
    %176 = vmatprep.subr.mxu0 0.0
    %177 = vmatpush1.msra.mxu0 %v72
    %178 = vmatprep.subr.mxu0 0.0
    %179 = vmatpush1.msra.mxu0 %v73
    %180 = vmatprep.subr.mxu0 0.0
    %181 = vmatpush1.msra.mxu0 %v74
    %182 = vmatprep.subr.mxu0 0.0
    %183 = vmatpush1.msra.mxu0 0.0
    %184 = vmatprep.subr.mxu0 0.0
    %185 = vmatpush1.msra.mxu0 0.0
    %186 = vmatprep.subr.mxu0 0.0
    %187 = vmatpush1.msra.mxu0 0.0
    %188 = vmatprep.subr.mxu0 0.0
    %189 = vmatpush1.msra.mxu0 0.0
    %190 = vmatprep.subr.mxu0 0.0
    %191 = vmatpush1.msra.mxu0 0.0
    %192 = vmatprep.subr.mxu0 0.0
    %193 = vmatpush1.msra.mxu0 0.0
    %194 = vmatprep.subr.mxu0 0.0
    %195 = vmatpush1.msra.mxu0 0.0
    %196 = vmatprep.subr.mxu0 0.0
    %197 = vmatpush1.msra.mxu0 0.0
    %198 = vmatprep.subr.mxu0 0.0
    %199 = vmatpush1.msra.mxu0 0.0
    %200 = vmatprep.subr.mxu0 0.0
    %201 = vmatpush1.msra.mxu0 0.0
    %202 = vmatprep.subr.mxu0 0.0
    %203 = vmatpush1.msra.mxu0 0.0
    %204 = vmatprep.subr.mxu0 0.0
    %205 = vmatpush1.msra.mxu0 0.0
    %206 = vmatprep.subr.mxu0 0.0
    %207 = vmatpush1.msra.mxu0 0.0
    %208 = vmatprep.subr.mxu0 0.0
    %209 = vmatpush1.msra.mxu0 0.0
    %210 = vmatprep.subr.mxu0 0.0
    %211 = vmatpush1.msra.mxu0 0.0
    %212 = vmatprep.subr.mxu0 0.0
    %213 = vmatpush1.msra.mxu0 0.0
    %214 = vmatprep.mubr.f32.mxu0 0.0
    %215 = vmatmul.mubr.f32.gmra.mrb[0].mxu0 %v23
    %v216 = vpop.f32.mrb[0].mxu0
    %v217 = vadd.f32 %v142, %v216
    %v218 = vpop.f32.mrb[0].mxu0
    %219 = vmatprep.mubr.f32.mxu0 0.0
    %220 = vmatmul.mubr.f32.gmra.mrb[0].mxu0 %v26
    %v221 = vpop.f32.mrb[0].mxu0
    %v222 = vadd.f32 %v147, %v221
    %v223 = vpop.f32.mrb[0].mxu0
    %224 = vdwg.mxu0
    %225 = vxpose.xlu0.b32.start [1/16] %v217, 128
    %226 = vxpose.xlu0.b32.cont [2/16] %v222, 128
    %227 = vxpose.xlu0.b32.cont [3/16] 0.0, 128
    %228 = vxpose.xlu0.b32.cont [4/16] 0.0, 128
    %229 = vxpose.xlu0.b32.cont [5/16] 0.0, 128
    %230 = vxpose.xlu0.b32.cont [6/16] 0.0, 128
    %231 = vxpose.xlu0.b32.cont [7/16] 0.0, 128
    %232 = vxpose.xlu0.b32.cont [8/16] 0.0, 128
    %233 = vxpose.xlu0.b32.cont [9/16] 0.0, 128
    %234 = vxpose.xlu0.b32.cont [10/16] 0.0, 128
    %235 = vxpose.xlu0.b32.cont [11/16] 0.0, 128
    %236 = vxpose.xlu0.b32.cont [12/16] 0.0, 128
    %237 = vxpose.xlu0.b32.cont [13/16] 0.0, 128
    %238 = vxpose.xlu0.b32.cont [14/16] 0.0, 128
    %239 = vxpose.xlu0.b32.cont [15/16] 0.0, 128
    %240 = vxpose.xlu0.b32.end [16/16] 0.0, 128
    %v241 = vpop.trf.xlu0
    %v242 = vpop.trf.xlu0
    %v243 = vpop.trf.xlu0
    %v244 = vpop.trf.xlu0
    %v245 = vpop.trf.xlu0
    %v246 = vpop.trf.xlu0
    %v247 = vpop.trf.xlu0
    %v248 = vpop.trf.xlu0
    %v249 = vpop.trf.xlu0
    %v250 = vpop.trf.xlu0
    %v251 = vpop.trf.xlu0
    %v252 = vpop.trf.xlu0
    %v253 = vpop.trf.xlu0
    %v254 = vpop.trf.xlu0
    %v255 = vpop.trf.xlu0
    %v256 = vpop.trf.xlu0
    %v257 = vld [vmem:[%s2] sm:$0xff]
    %v258 = vld [vmem:[%s2 + $0x8] sm:$0xff]
    %260 = vset.pattern.permute.xlu0 0
    %261 = vperm.xlu0 %260, %v257
    %v262 = vpop.permute.xlu0 %261
    %265 = vset.pattern.permute.xlu0 0
    %266 = vperm.xlu0 %265, %v258
    %v267 = vpop.permute.xlu0 %266
    %v269 = vadd.f32 %v241, %v262
    %v270 = vadd.f32 %v242, %v267
    %v271 = vmax.f32 %v270, 0.0
    %vm272 = vcmp.ne.f32.partialorder %v270, %v270
    %v273 = vadd.f32 %v270, 0.0
    %v274 = vand.u32 2147483647, %v270
    %v275 = vsub.f32 0.0, %v274
    %v276 = vmul.f32 %v275, 1.442695
    %v277 = vpow.pop %v276
    %v278 = vadd.f32 %v277, 1.0
    %v279 = vlog2.pop %v278
    %v280 = vmul.f32 %v279, 0.6931472
    %v281 = vmul.f32 -0.5, %v277
    %v282 = vadd.f32 %v281, 1.0
    %v283 = vmul.f32 %v282, %v277
    %v284 = vand.u32 2147483647, %v277
    %vm285 = vcmp.lt.f32.partialorder %v284, 0.0004427343
    %v286 = vsel %vm285, %v283, %v280
    %v287 = vadd.f32 %v271, %v286
    %v288 = vsel %vm272, %v273, %v287
    %v289 = vld [vmem:[%s3] sm:$0xff]
    %v290 = vmul.f32 %v289, %v288
    %v291 = vadd.f32 %v269, %v290
    %v292 = vlaneseq
    %v293 = vshrl.u32 %v292, 7
    %vm294 = vcmask 130048
    %v295 = vsel %vm294, %v291, -inf
    %v296 = vrot.slane %v295, 4
    %v297 = vmax.f32 %v295, %v296
    %v298 = vrot.slane %v297, 2
    %v299 = vmax.f32 %v297, %v298
    %v300 = vrot.slane %v299, 1
    %v301 = vmax.f32 %v299, %v300
    %vm302 = vcmp.eq.f32.partialorder %v291, %v301
    %v303 = vsel %vm302, %v293, 8
    %v304 = vsel %vm294, %v303, 2147483647
    %v305 = vrot.slane %v304, 4
    %vm306 = vcmp.lt.s32.totalorder %v304, %v305
    %v307 = vsel %vm306, %v304, %v305
    %v308 = vrot.slane %v307, 2
    %vm309 = vcmp.lt.s32.totalorder %v307, %v308
    %v310 = vsel %vm309, %v307, %v308
    %v311 = vrot.slane %v310, 1
    %vm312 = vcmp.lt.s32.totalorder %v310, %v311
    %v313 = vsel %vm312, %v310, %v311
    %vm314 = vcmp.eq.s32.totalorder %v293, %v313
    %v315 = vsel %vm314, -inf, %v291
    %v316 = vsel %vm294, %v315, -inf
    %v317 = vrot.slane %v316, 4
    %v318 = vmax.f32 %v316, %v317
    %v319 = vrot.slane %v318, 2
    %v320 = vmax.f32 %v318, %v319
    %v321 = vrot.slane %v320, 1
    %v322 = vmax.f32 %v320, %v321
    %vm323 = vcmp.eq.f32.partialorder %v315, %v322
    %v324 = vsel %vm323, %v293, 8
    %v325 = vsel %vm294, %v324, 2147483647
    %v326 = vrot.slane %v325, 4
    %vm327 = vcmp.lt.s32.totalorder %v325, %v326
    %v328 = vsel %vm327, %v325, %v326
    %v329 = vrot.slane %v328, 2
    %vm330 = vcmp.lt.s32.totalorder %v328, %v329
    %v331 = vsel %vm330, %v328, %v329
    %v332 = vrot.slane %v331, 1
    %vm333 = vcmp.lt.s32.totalorder %v331, %v332
    %v334 = vsel %vm333, %v331, %v332
    %vm335 = vcmp.eq.s32.totalorder %v293, %v334
    %vm336 = vmor %vm314, %vm335
    %v337 = vsub.f32 %v291, %v301
    %v338 = vmul.f32 %v337, 1.442695
    %v339 = vpow.pop %v338
    %v340 = vsel %vm336, %v339, 0.0
    %v341 = vsel %vm294, %v340, 0.0
    %v342 = vrot.slane %v341, 4
    %v343 = vadd.f32 %v341, %v342
    %v344 = vrot.slane %v343, 2
    %v345 = vadd.f32 %v343, %v344
    %v346 = vrot.slane %v345, 1
    %v347 = vadd.f32 %v345, %v346
    %v348 = vrcp.pop %v347
    %v349 = vmul.f32 %v340, %v348
    %350 = vst.msk [vmem:[#allocation2] sm:$0xff] %vm294, %v349
    %vm351 = vcmask 1040384
    %v352 = vsel %vm351, %v313, %v334
    %vm353 = vcmask 123904
    %354 = vst.msk [vmem:[#allocation4] sm:$0x3] %vm353, %v352
    // Predicated region
    $region18: #{_router_call.1} parent=1 // pred_check
      _
    $region19: #{_router_call.1} parent=1 // pred_check_branch
      %356 = sbr.rel (0) target = $region21
    $region20: #{_router_call.1} parent=1 // pred_region
      %s358 = ssub.s32 128, 128
      %359 = vsyncadd [#allocation3], %s358
      %s361 = sshll.u32 [#allocation2], 4
      %s362 = int_to_ptr.vmem [resolvable:$true] %s361
      %364 = dma.vmem_to_hbm [thread:$0]  %s362, 128, %s4, [#allocation3]
    $region21: #{_router_call.1} parent=1 // pred_fallthru
      _
    // Predicated region
    $region22: #{_router_call.1} parent=1 // pred_check
      _
    $region23: #{_router_call.1} parent=1 // pred_check_branch
      %366 = sbr.rel (0) target = $region25
    $region24: #{_router_call.1} parent=1 // pred_region
      %s368 = ssub.s32 32, 32
      %369 = vsyncadd [#allocation5], %s368
      %s371 = sshll.u32 [#allocation4], 4
      %s372 = int_to_ptr.vmem [resolvable:$true] %s371
      %374 = dma.vmem_to_hbm [thread:$0]  %s372, 32, %s5, [#allocation5]
    $region25: #{_router_call.1} parent=1 // pred_fallthru
      _
    // Predicated region
    $region26: #{_router_call.1} parent=1 // pred_check
      _
    $region27: #{_router_call.1} parent=1 // pred_check_branch
      %376 = sbr.rel (0) target = $region29
    $region28: #{_router_call.1} parent=1 // pred_region
      %377 = dma.done [#allocation3], 128
    $region29: #{_router_call.1} parent=1 // pred_fallthru
      _
    // Predicated region
    $region30: #{_router_call.1} parent=1 // pred_check
      _
    $region31: #{_router_call.1} parent=1 // pred_check_branch
      %379 = sbr.rel (0) target = $region33
    $region32: #{_router_call.1} parent=1 // pred_region
      %380 = dma.done [#allocation5], 32
    $region33: #{_router_call.1} parent=1 // pred_fallthru
      _
    %381 = vsyncpa [#allocation3], 1
    %382 = vsyncpa [#allocation5], 1

</llo_original>
